<compile_context>
chip_gen: v7x
topology: tpu7x:2x2x1
jax: 0.10.0
libtpu: 0.0.40
codegen_flags: <defaults>
</compile_context>

<pallas_src>
import jax
import jax.numpy as jnp
from jax.experimental import pallas as pl
from jax.experimental.pallas import tpu as pltpu


_MIN_THW = 512  # keep contiguous HBM segments >= ~2 KiB (f32) per (b, c) row


def _round_up(x, m):
    return ((x + m - 1) // m) * m


def _cdiv(a, b):
    return -(-a // b)


def _vmem_capacity_bytes():
    """Physical per-core VMEM; conservative (v7x-sized) fallback if unqueryable."""
    try:
        cap = int(pltpu.get_tpu_info().vmem_capacity_bytes)
        if cap > 0:
            return cap
    except Exception:
        pass
    return 64 << 20


def _channel_tiles(C):
    # Channel is the *sublane* axis of the input block and of the (bt, ct) output
    # block, so any multiple of 8 dividing C (or C itself) is legal.
    cands = {C}
    for d in range(8, C, 8):
        if C % d == 0:
            cands.add(d)
    return sorted(cands, reverse=True)


def _batch_tiles(B):
    return sorted({d for d in range(1, B + 1) if B % d == 0}, reverse=True)


def _pick_tiles(B, C, HW, itemsize, budget):
    """Choose (bt, ct, thw, HW_pad): bt|B, ct|C, thw|HW_pad, tile bytes <= budget."""
    ct_cands = _channel_tiles(C)
    bt_cands = _batch_tiles(B)
    thw_target = min(_round_up(HW, 128), _MIN_THW)

    # 1) Largest (ct, bt) that still leaves room for a >= thw_target HW tile:
    #    shrink ct / bt rather than letting thw collapse into tiny DMA segments.
    bt, ct = bt_cands[-1], ct_cands[-1]
    done = False
    for c in ct_cands:
        for b in bt_cands:
            if b * c * thw_target * itemsize <= budget:
                bt, ct = b, c
                done = True
                break
        if done:
            break

    # 2) Guarantee a parallel grid axis with extent >= 2 (v7x has 2 TensorCores).
    if (B // bt) * (C // ct) < 2:
        if bt > 1:
            bt = max(b for b in bt_cands if b < bt)
        elif len(ct_cands) > 1:
            ct = ct_cands[1]

    # 3) HW tile: as large as the budget allows. Prefer 128-multiple divisors of HW
    #    (no padding / extra HBM copy); otherwise pad HW to a balanced 128-aligned
    #    tile so blocks stay bounded and pipelined on every generation.
    cap = budget // (bt * ct * itemsize)
    if HW <= cap:
        return bt, ct, HW, HW  # single full-HW block (full dim => no 128 rule)
    cap128 = max(128, (cap // 128) * 128)
    d = cap128
    while d >= 128:
        if HW % d == 0:
            break
        d -= 128
    if d >= min(cap128, _MIN_THW) and HW % d == 0:
        return bt, ct, d, HW
    k = _cdiv(HW, cap128)
    thw = _round_up(_cdiv(HW, k), 128)
    return bt, ct, thw, thw * k


def _dice_sums_kernel(prd_ref, tgt_ref, inter_ref, union_ref):
    """Accumulate per-(example, channel) intersection / union over the HW axis."""
    k = pl.program_id(2)  # HW reduction step (innermost grid axis)

    @pl.when(k == 0)
    def _():
        inter_ref[...] = jnp.zeros_like(inter_ref)
        union_ref[...] = jnp.zeros_like(union_ref)

    p = prd_ref[...]  # (bt, ct, thw), native dtype
    t = tgt_ref[...]
    # Elementwise work in the native dtype, widen only for the f32 accumulation;
    # union uses one fused reduce over (p + t) instead of two separate reduces.
    inter_ref[...] += jnp.sum((p * t).astype(jnp.float32), axis=2)  # (bt, ct)
    union_ref[...] += jnp.sum((p + t).astype(jnp.float32), axis=2)  # (bt, ct)


def dice_coeff_metric(prd, tgt, eps: float = 1e-6, reduction: str = "none"):
    """prd, tgt: (B, C, H, W) arrays (NCHW). Returns (C,) for reduction='none'."""
    B, C, H, W = prd.shape
    HW = H * W

    # Free reshapes -- no transpose, no wrapper-side dtype cast.
    prd3 = jnp.reshape(prd, (B, C, HW))
    tgt3 = jnp.reshape(tgt, (B, C, HW))

    itemsize = max(jnp.dtype(prd.dtype).itemsize, jnp.dtype(tgt.dtype).itemsize)
    capacity = _vmem_capacity_bytes()
    # Generation-aware per-input tile budget: ~6 MiB when VMEM is v7x-sized
    # (64 MiB physical), ~8 MiB on 128-MiB-VMEM chips (v5e/v6e). The scoped-VMEM
    # limit is always set explicitly below, so the v5e 16-MiB default is irrelevant.
    budget = (6 << 20) if capacity <= (64 << 20) else (8 << 20)

    bt, ct, thw, HW_pad = _pick_tiles(B, C, HW, itemsize, budget)
    if HW_pad != HW:
        pad = HW_pad - HW  # zeros are neutral for both intersection and union
        prd3 = jnp.pad(prd3, ((0, 0), (0, 0), (0, pad)))
        tgt3 = jnp.pad(tgt3, ((0, 0), (0, 0), (0, pad)))

    nb, nc, nk = B // bt, C // ct, HW_pad // thw
    grid = (nb, nc, nk)

    # Double-buffered footprint check + explicit scoped-VMEM limit.
    in_bytes = 2 * bt * ct * thw * (jnp.dtype(prd3.dtype).itemsize
                                    + jnp.dtype(tgt3.dtype).itemsize)
    out_bytes = 2 * 2 * bt * ct * 4  # 2 outputs x 2 pipeline buffers, f32
    footprint = in_bytes + out_bytes
    vmem_limit = int(min(capacity - (8 << 20),
                         max(32 << 20, footprint + (16 << 20))))
    if footprint > vmem_limit:
        raise ValueError(
            f"dice kernel VMEM footprint {footprint} B exceeds limit {vmem_limit} B "
            f"(bt={bt}, ct={ct}, thw={thw}, capacity={capacity})")

    inter, union = pl.pallas_call(
        _dice_sums_kernel,
        out_shape=(jax.ShapeDtypeStruct((nb, nc, bt, ct), jnp.float32),
                   jax.ShapeDtypeStruct((nb, nc, bt, ct), jnp.float32)),
        grid_spec=pltpu.PrefetchScalarGridSpec(
            num_scalar_prefetch=0,
            grid=grid,
            in_specs=[
                pl.BlockSpec((bt, ct, thw), lambda bi, ci, k: (bi, ci, k)),
                pl.BlockSpec((bt, ct, thw), lambda bi, ci, k: (bi, ci, k)),
            ],
            out_specs=[
                # Block-major (NB, NC, bt, ct) outputs: last two block dims equal the
                # full array dims, so bt/ct carry no (8,128) constraints; blocks stay
                # resident across the HW reduction axis (written once per (bi, ci)).
                pl.BlockSpec((None, None, bt, ct), lambda bi, ci, k: (bi, ci, 0, 0)),
                pl.BlockSpec((None, None, bt, ct), lambda bi, ci, k: (bi, ci, 0, 0)),
            ],
        ),
        compiler_params=pltpu.CompilerParams(
            dimension_semantics=("parallel", "parallel", "arbitrary"),
            vmem_limit_bytes=vmem_limit),
    )(prd3, tgt3)

    # Tiny O(B*C) epilogue in plain JAX: per-example dice, then batch mean.
    inter = jnp.transpose(inter, (0, 2, 1, 3)).reshape(B, C)
    union = jnp.transpose(union, (0, 2, 1, 3)).reshape(B, C)
    dice = (2.0 * inter + eps) / (union + eps)  # (B, C)
    dice = jnp.mean(dice, axis=0)               # (C,)
    if reduction == "mean":
        return jnp.mean(dice)
    if reduction == "sum":
        return jnp.sum(dice)
    return dice  # "none"


def _reference(prd, tgt, eps: float = 1e-6):
    prd = prd.astype(jnp.float32)
    tgt = tgt.astype(jnp.float32)
    inter = jnp.sum(prd * tgt, axis=(2, 3))                      # (B, C)
    union = jnp.sum(prd, axis=(2, 3)) + jnp.sum(tgt, axis=(2, 3)) + eps
    dice = (2.0 * inter + eps) / union                           # (B, C)
    return jnp.mean(dice, axis=0)                                # (C,)


if __name__ == "__main__":
    key = jax.random.PRNGKey(0)
    k_prd, k_tgt = jax.random.split(key)
    B, C, H, W = 2, 4, 16, 16
    # predicted probabilities in [0, 1); binary-ish target masks
    prd = jax.random.uniform(k_prd, (B, C, H, W), dtype=jnp.float32)
    tgt = (jax.random.uniform(k_tgt, (B, C, H, W)) > 0.5).astype(jnp.float32)

    result = dice_coeff_metric(prd, tgt, eps=1e-6, reduction="none")
    result = jax.block_until_ready(result)

    ref = _reference(prd, tgt, eps=1e-6)
    assert result.shape == (C,), result.shape
    assert jnp.allclose(result, ref, rtol=1e-5, atol=1e-6), (result, ref)
    print("KERNEL_OK")
</pallas_src>

<mosaic_0001>
module attributes {stable_mosaic.version = 11 : i64} {
  func.func @_dice_sums_kernel(%arg0: i32, %arg1: i32, %arg2: i32, %arg3: memref<1x4x256xf32, #tpu.memory_space<vmem>>, %arg4: memref<1x4x256xf32, #tpu.memory_space<vmem>>, %arg5: memref<1x1x1x4xf32, #tpu.memory_space<vmem>>, %arg6: memref<1x1x1x4xf32, #tpu.memory_space<vmem>>) attributes {dimension_semantics = [#tpu.dimension_semantics<parallel>, #tpu.dimension_semantics<parallel>, #tpu.dimension_semantics<arbitrary>], iteration_bounds = array<i64: 2, 1, 1>, scalar_prefetch = 0 : i64, scratch_operands = 0 : i64, tpu.core_type = #tpu.core_type<tc>, window_params = [{transform_indices = @transform_0, window_bounds = array<i64: 1, 4, 256>}, {transform_indices = @transform_1, window_bounds = array<i64: 1, 4, 256>}, {transform_indices = @transform_2, window_bounds = array<i64: 1, 1, 1, 4>}, {transform_indices = @transform_3, window_bounds = array<i64: 1, 1, 1, 4>}]} {
    %c0_i32 = arith.constant 0 : i32
    %0 = arith.cmpi eq, %arg2, %c0_i32 : i32
    %1 = arith.extui %0 : i1 to i32
    %c0_i32_0 = arith.constant 0 : i32
    %2 = arith.cmpi ne, %1, %c0_i32_0 : i32
    scf.if %2 {
      %cst_23 = arith.constant 0.000000e+00 : f32
      %21 = vector.broadcast %cst_23 : f32 to vector<1x4xf32>
      %c0_24 = arith.constant 0 : index
      %c0_25 = arith.constant 0 : index
      %c0_26 = arith.constant 0 : index
      %c0_27 = arith.constant 0 : index
      %22 = vector.load %arg5[%c0_24, %c0_25, %c0_26, %c0_27] : memref<1x1x1x4xf32, #tpu.memory_space<vmem>>, vector<1x1x1x4xf32>
      %23 = vector.shape_cast %22 : vector<1x1x1x4xf32> to vector<1x4xf32>
      %24 = vector.shape_cast %21 : vector<1x4xf32> to vector<1x1x1x4xf32>
      tpu.vector_store %arg5[%c0_24, %c0_25, %c0_26, %c0_27], %24 {strides = array<i32>} : memref<1x1x1x4xf32, #tpu.memory_space<vmem>>, vector<1x1x1x4xf32>,
      %cst_28 = arith.constant 0.000000e+00 : f32
      %25 = vector.broadcast %cst_28 : f32 to vector<1x4xf32>
      %c0_29 = arith.constant 0 : index
      %c0_30 = arith.constant 0 : index
      %c0_31 = arith.constant 0 : index
      %c0_32 = arith.constant 0 : index
      %26 = vector.load %arg6[%c0_29, %c0_30, %c0_31, %c0_32] : memref<1x1x1x4xf32, #tpu.memory_space<vmem>>, vector<1x1x1x4xf32>
      %27 = vector.shape_cast %26 : vector<1x1x1x4xf32> to vector<1x4xf32>
      %28 = vector.shape_cast %25 : vector<1x4xf32> to vector<1x1x1x4xf32>
      tpu.vector_store %arg6[%c0_29, %c0_30, %c0_31, %c0_32], %28 {strides = array<i32>} : memref<1x1x1x4xf32, #tpu.memory_space<vmem>>, vector<1x1x1x4xf32>,
    } else {
    }
    %c0 = arith.constant 0 : index
    %c0_1 = arith.constant 0 : index
    %c0_2 = arith.constant 0 : index
    %3 = vector.load %arg3[%c0, %c0_1, %c0_2] : memref<1x4x256xf32, #tpu.memory_space<vmem>>, vector<1x4x256xf32>
    %c0_3 = arith.constant 0 : index
    %c0_4 = arith.constant 0 : index
    %c0_5 = arith.constant 0 : index
    %4 = vector.load %arg4[%c0_3, %c0_4, %c0_5] : memref<1x4x256xf32, #tpu.memory_space<vmem>>, vector<1x4x256xf32>
    %c0_6 = arith.constant 0 : index
    %c0_7 = arith.constant 0 : index
    %c0_8 = arith.constant 0 : index
    %c0_9 = arith.constant 0 : index
    %5 = vector.load %arg5[%c0_6, %c0_7, %c0_8, %c0_9] : memref<1x1x1x4xf32, #tpu.memory_space<vmem>>, vector<1x1x1x4xf32>
    %6 = vector.shape_cast %5 : vector<1x1x1x4xf32> to vector<1x4xf32>
    %7 = arith.mulf %3, %4 : vector<1x4x256xf32>
    %cst = arith.constant dense<0.000000e+00> : vector<1x4xf32>
    %8 = vector.multi_reduction <add>, %7, %cst [2] : vector<1x4x256xf32> to vector<1x4xf32>
    %9 = arith.addf %6, %8 : vector<1x4xf32>
    %c0_10 = arith.constant 0 : index
    %c0_11 = arith.constant 0 : index
    %c0_12 = arith.constant 0 : index
    %c0_13 = arith.constant 0 : index
    %10 = vector.load %arg5[%c0_10, %c0_11, %c0_12, %c0_13] : memref<1x1x1x4xf32, #tpu.memory_space<vmem>>, vector<1x1x1x4xf32>
    %11 = vector.shape_cast %10 : vector<1x1x1x4xf32> to vector<1x4xf32>
    %12 = vector.shape_cast %9 : vector<1x4xf32> to vector<1x1x1x4xf32>
    tpu.vector_store %arg5[%c0_10, %c0_11, %c0_12, %c0_13], %12 {strides = array<i32>} : memref<1x1x1x4xf32, #tpu.memory_space<vmem>>, vector<1x1x1x4xf32>,
    %c0_14 = arith.constant 0 : index
    %c0_15 = arith.constant 0 : index
    %c0_16 = arith.constant 0 : index
    %c0_17 = arith.constant 0 : index
    %13 = vector.load %arg6[%c0_14, %c0_15, %c0_16, %c0_17] : memref<1x1x1x4xf32, #tpu.memory_space<vmem>>, vector<1x1x1x4xf32>
    %14 = vector.shape_cast %13 : vector<1x1x1x4xf32> to vector<1x4xf32>
    %15 = arith.addf %3, %4 : vector<1x4x256xf32>
    %cst_18 = arith.constant dense<0.000000e+00> : vector<1x4xf32>
    %16 = vector.multi_reduction <add>, %15, %cst_18 [2] : vector<1x4x256xf32> to vector<1x4xf32>
    %17 = arith.addf %14, %16 : vector<1x4xf32>
    %c0_19 = arith.constant 0 : index
    %c0_20 = arith.constant 0 : index
    %c0_21 = arith.constant 0 : index
    %c0_22 = arith.constant 0 : index
    %18 = vector.load %arg6[%c0_19, %c0_20, %c0_21, %c0_22] : memref<1x1x1x4xf32, #tpu.memory_space<vmem>>, vector<1x1x1x4xf32>
    %19 = vector.shape_cast %18 : vector<1x1x1x4xf32> to vector<1x4xf32>
    %20 = vector.shape_cast %17 : vector<1x4xf32> to vector<1x1x1x4xf32>
    tpu.vector_store %arg6[%c0_19, %c0_20, %c0_21, %c0_22], %20 {strides = array<i32>} : memref<1x1x1x4xf32, #tpu.memory_space<vmem>>, vector<1x1x1x4xf32>,
    return
  }
  func.func @transform_0(%arg0: i32, %arg1: i32, %arg2: i32) -> (i32, i32, i32) {
    %c0_i32 = arith.constant 0 : i32
    return %arg0, %arg1, %arg2 : i32, i32, i32
  }
  func.func @transform_1(%arg0: i32, %arg1: i32, %arg2: i32) -> (i32, i32, i32) {
    %c0_i32 = arith.constant 0 : i32
    return %arg0, %arg1, %arg2 : i32, i32, i32
  }
  func.func @transform_2(%arg0: i32, %arg1: i32, %arg2: i32) -> (i32, i32, i32, i32) {
    %c0_i32 = arith.constant 0 : i32
    %c0_i32_0 = arith.constant 0 : i32
    %c0_i32_1 = arith.constant 0 : i32
    return %arg0, %arg1, %c0_i32, %c0_i32_0 : i32, i32, i32, i32
  }
  func.func @transform_3(%arg0: i32, %arg1: i32, %arg2: i32) -> (i32, i32, i32, i32) {
    %c0_i32 = arith.constant 0 : i32
    %c0_i32_0 = arith.constant 0 : i32
    %c0_i32_1 = arith.constant 0 : i32
    return %arg0, %arg1, %c0_i32, %c0_i32_0 : i32, i32, i32, i32
  }
}

</mosaic_0001>

<llo_original>
// kernel: tpu_custom_call.1
$region0: #{tpu_custom_call.1}
  #allocation0 [shape = 'u32[]', space=smem, size = 0x4, offset = 0x4, fixed_abs, tag = 'smem constant byte address 0x4 - core index']
  #allocation1 [shape = 'u32[144,128]{1,0:T(1,128)}', space=vmem, size = 0x12000, scoped, tag = 'internal scratch']
  %s0 = inlined_call_operand.hbm [shape: f32[2,4,256], index: 0, kind: input, shape index: {}]
  %s1 = inlined_call_operand.hbm [shape: f32[2,4,256], index: 1, kind: input, shape index: {}]
  %s2 = inlined_call_operand.hbm [shape: f32[2,1,1,4], index: 2, kind: output, shape index: {0}]
  %s3 = inlined_call_operand.hbm [shape: f32[2,1,1,4], index: 3, kind: output, shape index: {1}]
  %4 = xla_tuple %s2, %s3
  %s5 = sld [smem:[#allocation0]]
  $region61: #{tpu_custom_call.1} parent=0
    _
  %s7 = ssub.s32 1, %s5
  %s8 = scalar_select 0, %s7, %s5
  $region1: #{tpu_custom_call.1} parent=0
    #allocation2 [shape = 'u8[8192]{0}', space=vmem, size = 0x2000, scoped, tag = 'input window, operand 0']
    #allocation3 [shape = 's32[2]{0}', space=sflag, size = 0x8, scoped, tag = 'scoped memory for tpu_custom_call.1']
    #allocation4 [shape = 's32[2]{0}', space=sflag, size = 0x8, scoped, tag = 'scoped memory for tpu_custom_call.1']
    #allocation5 [shape = 'u8[8192]{0}', space=vmem, size = 0x2000, scoped, tag = 'input window, operand 1']
    #allocation6 [shape = 's32[2]{0}', space=sflag, size = 0x8, scoped, tag = 'scoped memory for tpu_custom_call.1']
    #allocation7 [shape = 'u8[1024]{0}', space=vmem, size = 0x400, scoped, tag = 'output window, operand 0']
    #allocation8 [shape = 'u8[1024]{0}', space=vmem, size = 0x400, scoped, tag = 'output window, operand 1']
    #allocation9 [shape = 's32[2]{0}', space=sflag, size = 0x8, scoped, tag = 'scoped memory for tpu_custom_call.1']
    %9 = vsyncpa [#allocation3], 0
    %s10 = scalar_lea.sflag [#allocation3], 1
    %11 = vsyncpa %s10, 0
    %12 = vsyncpa [#allocation6], 0
    %s13 = scalar_lea.sflag [#allocation6], 1
    %14 = vsyncpa %s13, 0
    %15 = vsyncpa [#allocation4], 0
    %s16 = scalar_lea.sflag [#allocation4], 1
    %17 = vsyncpa %s16, 0
    %18 = vsyncpa [#allocation9], 0
    %s19 = scalar_lea.sflag [#allocation9], 1
    %20 = vsyncpa %s19, 0
    loop: start=0, step=1, limit=4
    $region2: #{tpu_custom_call.1} parent=1 // loop_pre_header
      _
    $region3: #{tpu_custom_call.1} parent=1 // loop_header
      %s22 = sphi 0, %s26
      %p23 = scmp.ge.s32.totalorder %s22, 4
      %s29 = sphi 0, %s48
      %s30 = sphi 0, %s44
      %s31 = sphi 0, %s40
      %s32 = sphi 0, %s29
      %s33 = sphi 0, %s30
      %s34 = sphi 0, %s31
      %s35 = sphi 0, %s32
      %s36 = sphi 0, %s33
      %s37 = sphi 0, %s34
      %s55 = sphi 0, %s57
      %s58 = sphi 0, %s55
      %s59 = sphi 0, %s58
      %s75 = sphi 0, %s59
      %s85 = sphi 0, %s87
      %s88 = sphi 0, %s85
      %s89 = sphi 0, %s88
      %s105 = sphi 0, %s89
      %s113 = sphi 0, %s115
      %s116 = sphi 0, %s113
      %s117 = sphi 0, %s116
      %s133 = sphi 0, %s117
      %s141 = sphi 0, %s143
      %s144 = sphi 0, %s141
      %s145 = sphi 0, %s144
      %s161 = sphi 0, %s145
    $region4: #{tpu_custom_call.1} parent=1 // loop_header_branch
      %25 = sbr.rel (%p23) target = $region8
    $region5: #{tpu_custom_call.1} parent=1 // loop_body
      %s27 = ssub.s32 %s22, 1
      %s28 = ssub.s32 %s22, 2
      %s38 = sadd.s32 1, %s31
      %p39 = scmp.ge.s32.totalorder %s38, 1
      %s40 = scalar_select %p39, 0, %s38
      %s41 = sadd.s32 1, %s30
      %s42 = scalar_select %p39, %s41, %s30
      %p43 = scmp.ge.s32.totalorder %s42, 1
      %s44 = scalar_select %p43, 0, %s42
      %s45 = sadd.s32 1, %s29
      %s46 = scalar_select %p43, %s45, %s29
      %p47 = scmp.ge.s32.totalorder %s46, 2
      %s48 = scalar_select %p47, 0, %s46
      %s49 = ssub.s32 %s29, %s48
      %s50 = ssub.s32 %s30, %s44
      %s51 = sor.u32 %s49, %s50
      %s52 = ssub.s32 %s31, %s40
      %s53 = sor.u32 %s51, %s52
      %p54 = scmp.eq.s32.totalorder %s53, 0
      %s56 = sadd.s32 %s55, 1
      %s57 = scalar_select %p54, %s55, %s56
      %p60 = pneg %p54
      %p61 = scmp.eq.s32.totalorder %s22, 1
      %p62 = por %p60, %p61
      %p63 = scmp.ne.s32.totalorder %s55, %s58
      %p64 = scmp.eq.s32.totalorder %s22, 0
      %p65 = por %p63, %p64
      %p66 = scmp.ne.s32.totalorder %s55, %s58
      %p67 = scmp.eq.s32.totalorder %s27, 1
      %p68 = por %p66, %p67
      %p69 = scmp.ne.s32.totalorder %s58, %s59
      %p70 = scmp.eq.s32.totalorder %s27, 0
      %p71 = por %p69, %p70
      %p72 = scmp.ne.s32.totalorder %s58, %s59
      %p73 = scmp.eq.s32.totalorder %s28, 1
      %p74 = por %p72, %p73
      %p76 = scmp.ne.s32.totalorder %s59, %s75
      %p77 = scmp.eq.s32.totalorder %s28, 0
      %p78 = por %p76, %p77
      %s79 = ssub.s32 %s29, %s48
      %s80 = ssub.s32 %s30, %s44
      %s81 = sor.u32 %s79, %s80
      %s82 = ssub.s32 %s31, %s40
      %s83 = sor.u32 %s81, %s82
      %p84 = scmp.eq.s32.totalorder %s83, 0
      %s86 = sadd.s32 %s85, 1
      %s87 = scalar_select %p84, %s85, %s86
      %p90 = pneg %p84
      %p91 = scmp.eq.s32.totalorder %s22, 1
      %p92 = por %p90, %p91
      %p93 = scmp.ne.s32.totalorder %s85, %s88
      %p94 = scmp.eq.s32.totalorder %s22, 0
      %p95 = por %p93, %p94
      %p96 = scmp.ne.s32.totalorder %s85, %s88
      %p97 = scmp.eq.s32.totalorder %s27, 1
      %p98 = por %p96, %p97
      %p99 = scmp.ne.s32.totalorder %s88, %s89
      %p100 = scmp.eq.s32.totalorder %s27, 0
      %p101 = por %p99, %p100
      %p102 = scmp.ne.s32.totalorder %s88, %s89
      %p103 = scmp.eq.s32.totalorder %s28, 1
      %p104 = por %p102, %p103
      %p106 = scmp.ne.s32.totalorder %s89, %s105
      %p107 = scmp.eq.s32.totalorder %s28, 0
      %p108 = por %p106, %p107
      %s109 = ssub.s32 %s29, %s48
      %s110 = ssub.s32 %s30, %s44
      %s111 = sor.u32 %s109, %s110
      %p112 = scmp.eq.s32.totalorder %s111, 0
      %s114 = sadd.s32 %s113, 1
      %s115 = scalar_select %p112, %s113, %s114
      %p118 = pneg %p112
      %p119 = scmp.eq.s32.totalorder %s22, 1
      %p120 = por %p118, %p119
      %p121 = scmp.ne.s32.totalorder %s113, %s116
      %p122 = scmp.eq.s32.totalorder %s22, 0
      %p123 = por %p121, %p122
      %p124 = scmp.ne.s32.totalorder %s113, %s116
      %p125 = scmp.eq.s32.totalorder %s27, 1
      %p126 = por %p124, %p125
      %p127 = scmp.ne.s32.totalorder %s116, %s117
      %p128 = scmp.eq.s32.totalorder %s27, 0
      %p129 = por %p127, %p128
      %p130 = scmp.ne.s32.totalorder %s116, %s117
      %p131 = scmp.eq.s32.totalorder %s28, 1
      %p132 = por %p130, %p131
      %p134 = scmp.ne.s32.totalorder %s117, %s133
      %p135 = scmp.eq.s32.totalorder %s28, 0
      %p136 = por %p134, %p135
      %s137 = ssub.s32 %s29, %s48
      %s138 = ssub.s32 %s30, %s44
      %s139 = sor.u32 %s137, %s138
      %p140 = scmp.eq.s32.totalorder %s139, 0
      %s142 = sadd.s32 %s141, 1
      %s143 = scalar_select %p140, %s141, %s142
      %p146 = pneg %p140
      %p147 = scmp.eq.s32.totalorder %s22, 1
      %p148 = por %p146, %p147
      %p149 = scmp.ne.s32.totalorder %s141, %s144
      %p150 = scmp.eq.s32.totalorder %s22, 0
      %p151 = por %p149, %p150
      %p152 = scmp.ne.s32.totalorder %s141, %s144
      %p153 = scmp.eq.s32.totalorder %s27, 1
      %p154 = por %p152, %p153
      %p155 = scmp.ne.s32.totalorder %s144, %s145
      %p156 = scmp.eq.s32.totalorder %s27, 0
      %p157 = por %p155, %p156
      %p158 = scmp.ne.s32.totalorder %s144, %s145
      %p159 = scmp.eq.s32.totalorder %s28, 1
      %p160 = por %p158, %p159
      %p162 = scmp.ne.s32.totalorder %s145, %s161
      %p163 = scmp.eq.s32.totalorder %s28, 0
      %p164 = por %p162, %p163
      %p165 = scmp.le.s32.totalorder 1, %s22
      %p166 = scmp.lt.s32.totalorder %s22, 3
      %p167 = pnand %p165, %p166
      %p168 = pneg %p167
      // Predicated region
      $region9: #{tpu_custom_call.1} parent=5 // pred_check
        _
      $region10: #{tpu_custom_call.1} parent=5 // pred_check_branch
        %170 = sbr.rel (%p167) target = $region12
      $region11: #{tpu_custom_call.1} parent=5 // pred_region
        %s171 = ssub.s32 %s22, 1
      $region12: #{tpu_custom_call.1} parent=5 // pred_fallthru
        _
      %p172 = scmp.lt.s32.totalorder %s22, 2
      // Predicated region
      $region13: #{tpu_custom_call.1} parent=5 // pred_check
        %p173 = pneg %p172
      $region14: #{tpu_custom_call.1} parent=5 // pred_check_branch
        %175 = sbr.rel (%p173) target = $region16
      $region15: #{tpu_custom_call.1} parent=5 // pred_region
        // Predicated region
        $region17: #{tpu_custom_call.1} parent=15 // pred_check
          %p176 = pneg %p65
        $region18: #{tpu_custom_call.1} parent=15 // pred_check_branch
          %178 = sbr.rel (%p176) target = $region20
        $region19: #{tpu_custom_call.1} parent=15 // pred_region
          %s179 = sand.u32 %s55, 1
          %s180 = scalar_lea.sflag [#allocation3], %s179
          %s181 = sand.u32 %s55, 1
          %s182 = smul.addr %s181, 8
          %s183 = scalar_lea.vmem [#allocation2], %s182
          %s184 = smul.u32 2, %s31
          %s186 = ssub.s32 128, 128
          %187 = vsyncadd %s180, %s186
          %s188 = smul.addr %s30, 2
          %s189 = sadd.s32 %s184, %s188
          %s190 = smul.addr %s29, 2
          %s191 = sadd.s32 %s189, %s190
          %s192 = smul.addr %s191, 64
          %s193 = scalar_lea.hbm %s0, %s192
          %s195 = sshll.u32 %s183, 4
          %s196 = int_to_ptr.vmem [resolvable:$true] %s195
          %198 = dma.hbm_to_vmem [thread:$0]  %s193, 128, %s196, %s180
        $region20: #{tpu_custom_call.1} parent=15 // pred_fallthru
          _
        // Predicated region
        $region21: #{tpu_custom_call.1} parent=15 // pred_check
          %p199 = pneg %p95
        $region22: #{tpu_custom_call.1} parent=15 // pred_check_branch
          %201 = sbr.rel (%p199) target = $region24
        $region23: #{tpu_custom_call.1} parent=15 // pred_region
          %s202 = sand.u32 %s85, 1
          %s203 = scalar_lea.sflag [#allocation6], %s202
          %s204 = sand.u32 %s85, 1
          %s205 = smul.addr %s204, 8
          %s206 = scalar_lea.vmem [#allocation5], %s205
          %s207 = smul.u32 2, %s31
          %s209 = ssub.s32 128, 128
          %210 = vsyncadd %s203, %s209
          %s211 = smul.addr %s30, 2
          %s212 = sadd.s32 %s207, %s211
          %s213 = smul.addr %s29, 2
          %s214 = sadd.s32 %s212, %s213
          %s215 = smul.addr %s214, 64
          %s216 = scalar_lea.hbm %s1, %s215
          %s218 = sshll.u32 %s206, 4
          %s219 = int_to_ptr.vmem [resolvable:$true] %s218
          %221 = dma.hbm_to_vmem [thread:$0]  %s216, 128, %s219, %s203
        $region24: #{tpu_custom_call.1} parent=15 // pred_fallthru
          _
      $region16: #{tpu_custom_call.1} parent=5 // pred_fallthru
        _
      %p222 = scmp.le.s32.totalorder 1, %s22
      %p223 = scmp.lt.s32.totalorder %s22, 3
      %p224 = pnand %p222, %p223
      %p225 = pneg %p224
      // Predicated region
      $region25: #{tpu_custom_call.1} parent=5 // pred_check
        _
      $region26: #{tpu_custom_call.1} parent=5 // pred_check_branch
        %227 = sbr.rel (%p224) target = $region28
      $region27: #{tpu_custom_call.1} parent=5 // pred_region
        %s228 = ssub.s32 %s22, 1
        %s229 = sand.u32 %s58, 1
        %s230 = scalar_lea.sflag [#allocation3], %s229
        %s231 = sand.u32 %s58, 1
        %s232 = smul.addr %s231, 8
        %s233 = scalar_lea.vmem [#allocation2], %s232
        // Predicated region
        $region29: #{tpu_custom_call.1} parent=27 // pred_check
          %p234 = pneg %p71
        $region30: #{tpu_custom_call.1} parent=27 // pred_check_branch
          %236 = sbr.rel (%p234) target = $region32
        $region31: #{tpu_custom_call.1} parent=27 // pred_region
          %237 = dma.done %s230, 128
        $region32: #{tpu_custom_call.1} parent=27 // pred_fallthru
          _
        %s238 = sand.u32 %s88, 1
        %s239 = scalar_lea.sflag [#allocation6], %s238
        %s240 = sand.u32 %s88, 1
        %s241 = smul.addr %s240, 8
        %s242 = scalar_lea.vmem [#allocation5], %s241
        // Predicated region
        $region33: #{tpu_custom_call.1} parent=27 // pred_check
          %p243 = pneg %p101
        $region34: #{tpu_custom_call.1} parent=27 // pred_check_branch
          %245 = sbr.rel (%p243) target = $region36
        $region35: #{tpu_custom_call.1} parent=27 // pred_region
          %246 = dma.done %s239, 128
        $region36: #{tpu_custom_call.1} parent=27 // pred_fallthru
          _
        %s247 = sand.u32 %s58, 1
        %s248 = scalar_lea.sflag [#allocation3], %s247
        %s249 = sand.u32 %s58, 1
        %s250 = smul.addr %s249, 8
        %s251 = scalar_lea.vmem [#allocation2], %s250
        %p252 = pneg %p71
        %p253 = pneg %p68
        %s254 = sand.u32 %s88, 1
        %s255 = scalar_lea.sflag [#allocation6], %s254
        %s256 = sand.u32 %s88, 1
        %s257 = smul.addr %s256, 8
        %s258 = scalar_lea.vmem [#allocation5], %s257
        %p259 = pneg %p101
        %p260 = pneg %p98
        %p261 = pneg %p129
        %p262 = pneg %p126
        %s263 = sand.u32 %s116, 1
        %s264 = scalar_lea.sflag [#allocation4], %s263
        %s265 = sand.u32 %s116, 1
        %s266 = scalar_lea.vmem [#allocation7], %s265
        %p267 = pneg %p157
        %p268 = pneg %p154
        %s269 = sand.u32 %s144, 1
        %s270 = scalar_lea.sflag [#allocation9], %s269
        %s271 = sand.u32 %s144, 1
        %s272 = scalar_lea.vmem [#allocation8], %s271
        %s273 = smul.u32 2, %s34
        %s274 = smul.u32 2, %s34
        %p275 = scmp.eq.s32.totalorder %s34, 0
        // Predicated region
        $region37: #{tpu_custom_call.1} parent=27 // pred_check
          %p276 = pneg %p275
        $region38: #{tpu_custom_call.1} parent=27 // pred_check_branch
          %278 = sbr.rel (%p276) target = $region40
        $region39: #{tpu_custom_call.1} parent=27 // pred_region
          %vm279 = vcmask 24576
          %280 = vst.msk [vmem:[%s266] sm:$0x1] %vm279, 0.0
          %281 = vst.msk [vmem:[%s272] sm:$0x1] %vm279, 0.0
        $region40: #{tpu_custom_call.1} parent=27 // pred_fallthru
          _
        %v282 = vld [vmem:[%s233] sm:$0xff]
        %v283 = vld [vmem:[%s242] sm:$0xff]
        %v284 = vld [vmem:[%s266] sm:$0x1]
        %v285 = vmul.f32 %v282, %v283
        %v287 = vcombine.high %v285, %v285
        %vm289 = vcmask 1043456
        %v290 = vsel %vm289, %v285, 0.0
        %v291 = vsel %vm289, %v287, 0.0
        %v292 = vadd.f32 %v290, %v291
        %293 = vadd.xlane.f32.xlu0 %v292
        %v294 = vpop.xlane.xlu0 %293
        %v296 = vlaneseq
        %v297 = vshrl.u32 %v296, 7
        %v298 = vsub.s32 0, %v297
        %v299 = vrot.slane %v294, %v298
        %v300 = vlaneseq
        %v301 = vshrl.u32 %v300, 7
        %v302 = vsub.s32 1, %v301
        %v303 = vrot.slane %v294, %v302
        %v304 = vlaneseq
        %v305 = vshrl.u32 %v304, 7
        %v306 = vsub.s32 2, %v305
        %v307 = vrot.slane %v294, %v306
        %v308 = vlaneseq
        %v309 = vshrl.u32 %v308, 7
        %v310 = vsub.s32 3, %v309
        %v311 = vrot.slane %v294, %v310
        %v312 = vcombine.low %v299, %v303
        %v313 = vcombine.low %v307, %v311
        %v315 = vunpack.c.l.s4 1966171168
        %v316 = vunpack.c.0.s8 %v315
        %v317 = vlaneseq
        %v318 = vshrl.u32 %v317, 7
        %v319 = vsub.s32 %v316, %v318
        %v320 = vrot.slane %v312, %v319
        %v322 = vunpack.c.l.s4 1966171168
        %v323 = vunpack.c.0.s8 %v322
        %v324 = vlaneseq
        %v325 = vshrl.u32 %v324, 7
        %v326 = vsub.s32 %v323, %v325
        %v327 = vrot.slane %v313, %v326
        %v328 = vcombine.low %v320, %v327
        %v330 = vunpack.c.l.s4 1966171168
        %v331 = vunpack.c.0.s8 %v330
        %v332 = vlaneseq
        %v333 = vshrl.u32 %v332, 7
        %v334 = vsub.s32 %v331, %v333
        %v335 = vrot.slane %v328, %v334
        %336 = vset.pattern.permute.xlu0 0
        %337 = vperm.xlu0 %336, %v335
        %v338 = vpop.permute.xlu0 %337
        %v339 = vlaneseq
        %v340 = vand.u32 %v339, 127
        %v341 = vlaneseq
        %v342 = vshrl.u32 %v341, 7
        %v343 = vsub.s32 %v340, %v342
        %v344 = vrot.slane %v338, %v343
        %v346 = vunpack.c.l.s4 1966171168
        %v347 = vunpack.c.0.s8 %v346
        %v348 = vlaneseq
        %v349 = vshrl.u32 %v348, 7
        %v350 = vsub.s32 %v347, %v349
        %v351 = vrot.slane %v344, %v350
        %v353 = vunpack.c.l.s4 1966171168
        %v354 = vunpack.c.0.s8 %v353
        %v355 = vlaneseq
        %v356 = vshrl.u32 %v355, 7
        %v357 = vsub.s32 %v354, %v356
        %v358 = vrot.slane %v351, %v357
        %v360 = vadd.f32 %v284, %v358
        %vm361 = vcmask 24576
        %362 = vst.msk [vmem:[%s266] sm:$0x1] %vm361, %v360
        %v363 = vld [vmem:[%s272] sm:$0x1]
        %v364 = vadd.f32 %v282, %v283
        %v366 = vcombine.high %v364, %v364
        %v368 = vsel %vm289, %v364, 0.0
        %v369 = vsel %vm289, %v366, 0.0
        %v370 = vadd.f32 %v368, %v369
        %371 = vadd.xlane.f32.xlu0 %v370
        %v372 = vpop.xlane.xlu0 %371
        %v374 = vlaneseq
        %v375 = vshrl.u32 %v374, 7
        %v376 = vsub.s32 0, %v375
        %v377 = vrot.slane %v372, %v376
        %v378 = vlaneseq
        %v379 = vshrl.u32 %v378, 7
        %v380 = vsub.s32 1, %v379
        %v381 = vrot.slane %v372, %v380
        %v382 = vlaneseq
        %v383 = vshrl.u32 %v382, 7
        %v384 = vsub.s32 2, %v383
        %v385 = vrot.slane %v372, %v384
        %v386 = vlaneseq
        %v387 = vshrl.u32 %v386, 7
        %v388 = vsub.s32 3, %v387
        %v389 = vrot.slane %v372, %v388
        %v390 = vcombine.low %v377, %v381
        %v391 = vcombine.low %v385, %v389
        %v393 = vunpack.c.l.s4 1966171168
        %v394 = vunpack.c.0.s8 %v393
        %v395 = vlaneseq
        %v396 = vshrl.u32 %v395, 7
        %v397 = vsub.s32 %v394, %v396
        %v398 = vrot.slane %v390, %v397
        %v400 = vunpack.c.l.s4 1966171168
        %v401 = vunpack.c.0.s8 %v400
        %v402 = vlaneseq
        %v403 = vshrl.u32 %v402, 7
        %v404 = vsub.s32 %v401, %v403
        %v405 = vrot.slane %v391, %v404
        %v406 = vcombine.low %v398, %v405
        %v408 = vunpack.c.l.s4 1966171168
        %v409 = vunpack.c.0.s8 %v408
        %v410 = vlaneseq
        %v411 = vshrl.u32 %v410, 7
        %v412 = vsub.s32 %v409, %v411
        %v413 = vrot.slane %v406, %v412
        %414 = vset.pattern.permute.xlu0 0
        %415 = vperm.xlu0 %414, %v413
        %v416 = vpop.permute.xlu0 %415
        %v417 = vlaneseq
        %v418 = vshrl.u32 %v417, 7
        %v419 = vsub.s32 %v340, %v418
        %v420 = vrot.slane %v416, %v419
        %v422 = vunpack.c.l.s4 1966171168
        %v423 = vunpack.c.0.s8 %v422
        %v424 = vlaneseq
        %v425 = vshrl.u32 %v424, 7
        %v426 = vsub.s32 %v423, %v425
        %v427 = vrot.slane %v420, %v426
        %v429 = vunpack.c.l.s4 1966171168
        %v430 = vunpack.c.0.s8 %v429
        %v431 = vlaneseq
        %v432 = vshrl.u32 %v431, 7
        %v433 = vsub.s32 %v430, %v432
        %v434 = vrot.slane %v427, %v433
        %v436 = vadd.f32 %v363, %v434
        %437 = vst.msk [vmem:[%s272] sm:$0x1] %vm361, %v436
        %s438 = sand.u32 %s116, 1
        %s439 = scalar_lea.sflag [#allocation4], %s438
        %s440 = sand.u32 %s116, 1
        %s441 = scalar_lea.vmem [#allocation7], %s440
        %s442 = sand.u32 %s144, 1
        %s443 = scalar_lea.sflag [#allocation9], %s442
        %s444 = sand.u32 %s144, 1
        %s445 = scalar_lea.vmem [#allocation8], %s444
        // Predicated region
        $region41: #{tpu_custom_call.1} parent=27 // pred_check
          %p446 = pneg %p126
        $region42: #{tpu_custom_call.1} parent=27 // pred_check_branch
          %448 = sbr.rel (%p446) target = $region44
        $region43: #{tpu_custom_call.1} parent=27 // pred_region
          %s450 = ssub.s32 16, 16
          %451 = vsyncadd %s439, %s450
          %s452 = sadd.s32 %s33, %s32
          %s453 = smul.addr %s452, 16
          %s454 = scalar_lea.hbm %s2, %s453
          %s456 = sshll.u32 %s441, 4
          %s457 = int_to_ptr.vmem [resolvable:$true] %s456
          %459 = dma.vmem_to_hbm [thread:$0]  %s457, 16, %s454, %s439
        $region44: #{tpu_custom_call.1} parent=27 // pred_fallthru
          _
        // Predicated region
        $region45: #{tpu_custom_call.1} parent=27 // pred_check
          %p460 = pneg %p154
        $region46: #{tpu_custom_call.1} parent=27 // pred_check_branch
          %462 = sbr.rel (%p460) target = $region48
        $region47: #{tpu_custom_call.1} parent=27 // pred_region
          %s464 = ssub.s32 16, 16
          %465 = vsyncadd %s443, %s464
          %s466 = sadd.s32 %s33, %s32
          %s467 = smul.addr %s466, 16
          %s468 = scalar_lea.hbm %s3, %s467
          %s470 = sshll.u32 %s445, 4
          %s471 = int_to_ptr.vmem [resolvable:$true] %s470
          %473 = dma.vmem_to_hbm [thread:$0]  %s471, 16, %s468, %s443
        $region48: #{tpu_custom_call.1} parent=27 // pred_fallthru
          _
      $region28: #{tpu_custom_call.1} parent=5 // pred_fallthru
        _
      %p474 = scmp.le.s32.totalorder 2, %s22
      // Predicated region
      $region49: #{tpu_custom_call.1} parent=5 // pred_check
        %p475 = pneg %p474
      $region50: #{tpu_custom_call.1} parent=5 // pred_check_branch
        %477 = sbr.rel (%p475) target = $region52
      $region51: #{tpu_custom_call.1} parent=5 // pred_region
        %s478 = ssub.s32 %s22, 2
        // Predicated region
        $region53: #{tpu_custom_call.1} parent=51 // pred_check
          %p479 = pneg %p132
        $region54: #{tpu_custom_call.1} parent=51 // pred_check_branch
          %481 = sbr.rel (%p479) target = $region56
        $region55: #{tpu_custom_call.1} parent=51 // pred_region
          %s482 = sand.u32 %s117, 1
          %s483 = scalar_lea.sflag [#allocation4], %s482
          %s484 = sand.u32 %s117, 1
          %s485 = scalar_lea.vmem [#allocation7], %s484
          %486 = dma.done %s483, 16
        $region56: #{tpu_custom_call.1} parent=51 // pred_fallthru
          _
        // Predicated region
        $region57: #{tpu_custom_call.1} parent=51 // pred_check
          %p487 = pneg %p160
        $region58: #{tpu_custom_call.1} parent=51 // pred_check_branch
          %489 = sbr.rel (%p487) target = $region60
        $region59: #{tpu_custom_call.1} parent=51 // pred_region
          %s490 = sand.u32 %s145, 1
          %s491 = scalar_lea.sflag [#allocation9], %s490
          %s492 = sand.u32 %s145, 1
          %s493 = scalar_lea.vmem [#allocation8], %s492
          %494 = dma.done %s491, 16
        $region60: #{tpu_custom_call.1} parent=51 // pred_fallthru
          _
      $region52: #{tpu_custom_call.1} parent=5 // pred_fallthru
        _
    $region6: #{tpu_custom_call.1} parent=1 // loop_footer
      %s26 = sadd.s32 1, %s22
    $region7: #{tpu_custom_call.1} parent=1 // loop_footer_branch
      %21 = sbr.rel target = $region3
    $region8: #{tpu_custom_call.1} parent=1 // loop_exit
      _
    %495 = vsyncpa [#allocation3], 1
    %s496 = scalar_lea.sflag [#allocation3], 1
    %497 = vsyncpa %s496, 1
    %498 = vsyncpa [#allocation6], 1
    %s499 = scalar_lea.sflag [#allocation6], 1
    %500 = vsyncpa %s499, 1
    %501 = vsyncpa [#allocation4], 1
    %s502 = scalar_lea.sflag [#allocation4], 1
    %503 = vsyncpa %s502, 1
    %504 = vsyncpa [#allocation9], 1
    %s505 = scalar_lea.sflag [#allocation9], 1
    %506 = vsyncpa %s505, 1

</llo_original>
